<compile_context>
chip_gen: v5e
topology: v5e:2x2
jax: 0.10.0
libtpu: 0.0.40
codegen_flags: <defaults>
</compile_context>

<pallas_src>
import functools

import jax
import jax.numpy as jnp
from jax.experimental import pallas as pl
from jax.experimental.pallas import tpu as pltpu


def _round_up(n: int, m: int) -> int:
    return ((n + m - 1) // m) * m


def _novelty_kernel(x_ref, w1t_ref, b1_ref, w2_ref, b2_ref, o_ref, *, compute_dtype):
    # x_ref  : (tb, D_in)  f32   -- streamed batch tile
    # w1t_ref: (D_in, H)   bf16  -- resident (fc_2 weight, pre-transposed)
    # b1_ref : (1, H)      f32   -- resident (fc_2 bias)
    # w2_ref : (1, H)      f32   -- resident (detector weight)
    # b2_ref : (1,)        f32   -- SMEM scalar (detector bias)
    # o_ref  : (tb, 1)     f32
    x = x_ref[...].astype(compute_dtype)                       # in-kernel cast, f32 acc below
    h = jnp.dot(x, w1t_ref[...], preferred_element_type=jnp.float32)   # (tb, H)
    h = jnp.maximum(h + b1_ref[...], 0.0)                      # relu(fc_2(x)), f32 VPU
    # detector: 1-wide output -> VPU multiply + cross-lane reduce (XLU), not MXU
    out = jnp.sum(h * w2_ref[...], axis=1, keepdims=True) + b2_ref[0]
    o_ref[...] = out.astype(o_ref.dtype)


@functools.partial(jax.jit, static_argnames=("tile_b", "use_bf16"))
def novelty_detect_forward(x, w1, b1, w2, b2, *, tile_b=2048, use_bf16=True):
    """x: (B, D_in) f32. Params in PyTorch layout:
       w1 (H, D_in), b1 (H,), w2 (1, H), b2 (1,).  Returns (B, 1) f32.

       Note: use_bf16=True rounds x and w1 to bf16 before the MXU (f32
       accumulation); vs a pure-f32 PyTorch reference this gives ~1e-2-scale
       relative error.  Set use_bf16=False for exact-f32 numerics."""
    B, D_in = x.shape
    H = w1.shape[0]
    assert w1.shape == (H, D_in)
    assert b1.shape == (H,)
    assert w2.shape == (1, H)
    assert b2.shape == (1,)

    # Batch tiling along the sublane axis.
    if B <= 256:
        tb = _round_up(max(B, 1), 8)          # single tile for tiny batches
    else:
        # Large tiles to amortize per-step overhead, but keep >= 2 grid steps
        # so v7x can shard the batch across both TensorCores.
        tb = min(tile_b, _round_up(-(-B // 2), 128))
    b_pad = _round_up(B, tb)
    grid = (b_pad // tb,)

    # Skip the pad copy when the batch is already tile-aligned.
    x_in = x if b_pad == B else jnp.pad(x, ((0, b_pad - B), (0, 0)))

    cdt = jnp.bfloat16 if use_bf16 else jnp.float32
    w1t = w1.T.astype(cdt)                        # (D_in, H)  tiny, one-time
    b1r = b1.reshape(1, H).astype(jnp.float32)    # (1, H)
    w2r = w2.reshape(1, H).astype(jnp.float32)    # (1, H)
    b2r = b2.astype(jnp.float32)                  # (1,) -> SMEM scalar

    bytes_accessed = (b_pad * D_in * 4            # x (f32, read directly)
                      + D_in * H * (2 if use_bf16 else 4)
                      + 2 * H * 4
                      + b_pad * 4)                # output

    out = pl.pallas_call(
        functools.partial(_novelty_kernel, compute_dtype=cdt),
        out_shape=jax.ShapeDtypeStruct((b_pad, 1), jnp.float32),
        grid=grid,
        in_specs=[
            pl.BlockSpec((tb, D_in), lambda i: (i, 0)),          # streamed x tile
            pl.BlockSpec((D_in, H), lambda i: (0, 0)),           # resident W1^T
            pl.BlockSpec((1, H), lambda i: (0, 0)),              # resident b1
            pl.BlockSpec((1, H), lambda i: (0, 0)),              # resident w2
            pl.BlockSpec(memory_space=pltpu.MemorySpace.SMEM),   # b2 scalar in SMEM
        ],
        out_specs=pl.BlockSpec((tb, 1), lambda i: (i, 0)),
        compiler_params=pltpu.CompilerParams(
            dimension_semantics=("parallel",),   # batch-independent steps
        ),
        cost_estimate=pl.CostEstimate(
            flops=2 * b_pad * D_in * H + 4 * b_pad * H,
            transcendentals=0,
            bytes_accessed=bytes_accessed,
        ),
    )(x_in, w1t, b1r, w2r, b2r)

    return out if b_pad == B else out[:B]


def make_params(key, d_in, hidden):
    """Deterministic init mimicking nn.Linear's U(-1/sqrt(fan_in), 1/sqrt(fan_in)).
       Returns params in PyTorch layout."""
    k1, k2, k3, k4 = jax.random.split(key, 4)
    bound1 = 1.0 / jnp.sqrt(jnp.float32(d_in))
    bound2 = 1.0 / jnp.sqrt(jnp.float32(hidden))
    w1 = jax.random.uniform(k1, (hidden, d_in), jnp.float32, -bound1, bound1)
    b1 = jax.random.uniform(k2, (hidden,), jnp.float32, -bound1, bound1)
    w2 = jax.random.uniform(k3, (1, hidden), jnp.float32, -bound2, bound2)
    b2 = jax.random.uniform(k4, (1,), jnp.float32, -bound2, bound2)
    return w1, b1, w2, b2


def _reference(x, w1, b1, w2, b2, use_bf16):
    # Same forward, plain JAX, matching the kernel's bf16-input / f32-accumulate numerics.
    if use_bf16:
        x = x.astype(jnp.bfloat16).astype(jnp.float32)
        w1 = w1.astype(jnp.bfloat16).astype(jnp.float32)
    h = jnp.maximum(x @ w1.T + b1[None, :], 0.0)
    return h @ w2.T + b2[None, :]


if __name__ == "__main__":
    # Config: config.state_num = 95 -> D_in = 95 + 1 - 40 = 56,
    # config.hidden_state = 32.
    state_num = 95
    hidden_state = 32
    d_in = state_num + 1 - 40

    key = jax.random.PRNGKey(0)
    k_x1, k_x2, k_p = jax.random.split(key, 3)
    w1, b1, w2, b2 = make_params(k_p, d_in, hidden_state)

    # Case 1: tiny batch (original toy config, B=8) -> single padded tile.
    x_small = jax.random.normal(k_x1, (8, d_in), jnp.float32)
    out_small = jax.block_until_ready(novelty_detect_forward(x_small, w1, b1, w2, b2))
    ref_small = _reference(x_small, w1, b1, w2, b2, use_bf16=True)
    assert out_small.shape == (8, 1)
    assert jnp.allclose(out_small, ref_small, atol=1e-4, rtol=1e-4)

    # Case 2: larger batch -> exercises the >=2-step grid (tb=256, 2 steps).
    x_big = jax.random.normal(k_x2, (512, d_in), jnp.float32)
    out_big = jax.block_until_ready(novelty_detect_forward(x_big, w1, b1, w2, b2))
    ref_big = _reference(x_big, w1, b1, w2, b2, use_bf16=True)
    assert out_big.shape == (512, 1)
    assert jnp.allclose(out_big, ref_big, atol=1e-4, rtol=1e-4)

    print("KERNEL_OK")
</pallas_src>

<mosaic_0001>
module attributes {stable_mosaic.version = 11 : i64} {
  func.func @_novelty_kernel(%arg0: i32, %arg1: memref<8x56xf32, #tpu.memory_space<vmem>>, %arg2: memref<56x32xbf16, #tpu.memory_space<vmem>>, %arg3: memref<1x32xf32, #tpu.memory_space<vmem>>, %arg4: memref<1x32xf32, #tpu.memory_space<vmem>>, %arg5: memref<1xf32, #tpu.memory_space<smem>>, %arg6: memref<8x1xf32, #tpu.memory_space<vmem>>) attributes {dimension_semantics = [#tpu.dimension_semantics<parallel>], iteration_bounds = array<i64: 1>, scalar_prefetch = 0 : i64, scratch_operands = 0 : i64, tpu.core_type = #tpu.core_type<tc>, window_params = [{transform_indices = @transform_0, window_bounds = array<i64: 8, 56>}, {pipeline_mode = #tpu.pipeline_mode<synchronous>, transform_indices = @transform_1, window_bounds = array<i64: 56, 32>}, {pipeline_mode = #tpu.pipeline_mode<synchronous>, transform_indices = @transform_2, window_bounds = array<i64: 1, 32>}, {pipeline_mode = #tpu.pipeline_mode<synchronous>, transform_indices = @transform_3, window_bounds = array<i64: 1, 32>}, {transform_indices = @transform_4, window_bounds = array<i64: 1>}, {transform_indices = @transform_5, window_bounds = array<i64: 8, 1>}]} {
    %c0 = arith.constant 0 : index
    %c0_0 = arith.constant 0 : index
    %0 = vector.load %arg1[%c0, %c0_0] : memref<8x56xf32, #tpu.memory_space<vmem>>, vector<8x56xf32>
    %1 = arith.truncf %0 : vector<8x56xf32> to vector<8x56xbf16>
    %c0_1 = arith.constant 0 : index
    %c0_2 = arith.constant 0 : index
    %2 = vector.load %arg2[%c0_1, %c0_2] : memref<56x32xbf16, #tpu.memory_space<vmem>>, vector<56x32xbf16>
    %cst = arith.constant dense<0.000000e+00> : vector<8x32xf32>
    %3 = tpu.matmul %1, %2, %cst {dimension_numbers = #tpu.dot_dimension_numbers<[1], [0], [0], [1], [0, 0, 1, 1], [], []>} : vector<8x56xbf16>, vector<56x32xbf16>, vector<8x32xf32> -> vector<8x32xf32>
    %c0_3 = arith.constant 0 : index
    %c0_4 = arith.constant 0 : index
    %4 = vector.load %arg3[%c0_3, %c0_4] : memref<1x32xf32, #tpu.memory_space<vmem>>, vector<1x32xf32>
    %5 = vector.broadcast %4 : vector<1x32xf32> to vector<8x32xf32>
    %6 = arith.addf %3, %5 : vector<8x32xf32>
    %cst_5 = arith.constant 0.000000e+00 : f32
    %7 = vector.broadcast %cst_5 : f32 to vector<8x32xf32>
    %8 = arith.maximumf %6, %7 : vector<8x32xf32>
    %c0_6 = arith.constant 0 : index
    %c0_7 = arith.constant 0 : index
    %9 = vector.load %arg4[%c0_6, %c0_7] : memref<1x32xf32, #tpu.memory_space<vmem>>, vector<1x32xf32>
    %10 = vector.broadcast %9 : vector<1x32xf32> to vector<8x32xf32>
    %11 = arith.mulf %8, %10 : vector<8x32xf32>
    %cst_8 = arith.constant dense<0.000000e+00> : vector<8xf32>
    %12 = vector.multi_reduction <add>, %11, %cst_8 [1] : vector<8x32xf32> to vector<8xf32>
    %13 = vector.shape_cast %12 : vector<8xf32> to vector<8x1xf32>
    %c0_9 = arith.constant 0 : index
    %14 = memref.load %arg5[%c0_9] : memref<1xf32, #tpu.memory_space<smem>>
    %15 = vector.broadcast %14 : f32 to vector<8x1xf32>
    %16 = arith.addf %13, %15 : vector<8x1xf32>
    %c0_10 = arith.constant 0 : index
    %c0_11 = arith.constant 0 : index
    %17 = vector.load %arg6[%c0_10, %c0_11] : memref<8x1xf32, #tpu.memory_space<vmem>>, vector<8x1xf32>
    tpu.vector_store %arg6[%c0_10, %c0_11], %16 {strides = array<i32>} : memref<8x1xf32, #tpu.memory_space<vmem>>, vector<8x1xf32>,
    return
  }
  func.func @transform_0(%arg0: i32) -> (i32, i32) {
    %c0_i32 = arith.constant 0 : i32
    %c0_i32_0 = arith.constant 0 : i32
    return %arg0, %c0_i32 : i32, i32
  }
  func.func @transform_1(%arg0: i32) -> (i32, i32) {
    %c0_i32 = arith.constant 0 : i32
    %c0_i32_0 = arith.constant 0 : i32
    %c0_i32_1 = arith.constant 0 : i32
    return %c0_i32, %c0_i32_0 : i32, i32
  }
  func.func @transform_2(%arg0: i32) -> (i32, i32) {
    %c0_i32 = arith.constant 0 : i32
    %c0_i32_0 = arith.constant 0 : i32
    %c0_i32_1 = arith.constant 0 : i32
    return %c0_i32, %c0_i32_0 : i32, i32
  }
  func.func @transform_3(%arg0: i32) -> (i32, i32) {
    %c0_i32 = arith.constant 0 : i32
    %c0_i32_0 = arith.constant 0 : i32
    %c0_i32_1 = arith.constant 0 : i32
    return %c0_i32, %c0_i32_0 : i32, i32
  }
  func.func @transform_4(%arg0: i32) -> i32 {
    %c0_i32 = arith.constant 0 : i32
    %c0_i32_0 = arith.constant 0 : i32
    return %c0_i32 : i32
  }
  func.func @transform_5(%arg0: i32) -> (i32, i32) {
    %c0_i32 = arith.constant 0 : i32
    %c0_i32_0 = arith.constant 0 : i32
    return %arg0, %c0_i32 : i32, i32
  }
}

</mosaic_0001>

<llo_original>
// kernel: novelty_detect_forward.1
$region0: #{novelty_detect_forward.1}
  #allocation0 [shape = 'u32[]', space=smem, size = 0x4, offset = 0x4, fixed_abs, tag = 'smem constant byte address 0x4 - core index']
  #allocation1 [shape = 'u32[72,128]{1,0:T(1,128)}', space=vmem, size = 0x9000, scoped, tag = 'internal scratch']
  #allocation2 [shape = 'f32[1]{0:T(128)S(6)}', space=smem, size = 0x200, scoped, tag = 'scoped memory for novelty_detect_forward.1']
  %s0 = inlined_call_operand.vmem [shape: f32[8,56], index: 0, kind: input, shape index: {}]
  %s1 = inlined_call_operand.vmem [shape: bf16[56,32], index: 1, kind: input, shape index: {}]
  %s2 = inlined_call_operand.vmem [shape: f32[1,32], index: 2, kind: input, shape index: {}]
  %s3 = inlined_call_operand.vmem [shape: f32[1,32], index: 3, kind: input, shape index: {}]
  %s4 = inlined_call_operand.<no memory space> [shape: f32[1], index: 4, kind: input, shape index: {}]
  %s5 = inlined_call_operand.vmem [shape: f32[8,1], index: 5, kind: output, shape index: {}]
  %s6 = sld [smem:[#allocation0]]
  $region30: #{novelty_detect_forward.1} parent=0
    _
  %s8 = ssub.s32 1, %s6
  %s9 = scalar_select 0, %s8, %s6
  %10 = sst [smem:[#allocation2]] %s4
  // Predicated region
  $region2: #{novelty_detect_forward.1} parent=0 // pred_check
    _
  $region3: #{novelty_detect_forward.1} parent=0 // pred_check_branch
    %12 = sbr.rel (0) target = $region5
  $region4: #{novelty_detect_forward.1} parent=0 // pred_region
    _
  $region5: #{novelty_detect_forward.1} parent=0 // pred_fallthru
    _
  // Predicated region
  $region6: #{novelty_detect_forward.1} parent=0 // pred_check
    _
  $region7: #{novelty_detect_forward.1} parent=0 // pred_check_branch
    %14 = sbr.rel (0) target = $region9
  $region8: #{novelty_detect_forward.1} parent=0 // pred_region
    _
  $region9: #{novelty_detect_forward.1} parent=0 // pred_fallthru
    _
  // Predicated region
  $region10: #{novelty_detect_forward.1} parent=0 // pred_check
    _
  $region11: #{novelty_detect_forward.1} parent=0 // pred_check_branch
    %16 = sbr.rel (0) target = $region13
  $region12: #{novelty_detect_forward.1} parent=0 // pred_region
    _
  $region13: #{novelty_detect_forward.1} parent=0 // pred_fallthru
    _
  // Predicated region
  $region14: #{novelty_detect_forward.1} parent=0 // pred_check
    _
  $region15: #{novelty_detect_forward.1} parent=0 // pred_check_branch
    %18 = sbr.rel (0) target = $region17
  $region16: #{novelty_detect_forward.1} parent=0 // pred_region
    _
  $region17: #{novelty_detect_forward.1} parent=0 // pred_fallthru
    _
  // Predicated region
  $region18: #{novelty_detect_forward.1} parent=0 // pred_check
    _
  $region19: #{novelty_detect_forward.1} parent=0 // pred_check_branch
    %20 = sbr.rel (0) target = $region21
  $region20: #{novelty_detect_forward.1} parent=0 // pred_region
    _
  $region21: #{novelty_detect_forward.1} parent=0 // pred_fallthru
    _
  %v22 = vld [vmem:[%s0] sm:$0xff]
  %v23 = vpack.c.bf16 %v22, %v22
  %v24 = vld [vmem:[%s1] sm:$0xf]
  %v25 = vld [vmem:[%s1 + $0x4] sm:$0xf]
  %v26 = vld [vmem:[%s1 + $0x8] sm:$0xf]
  %v27 = vld [vmem:[%s1 + $0xc] sm:$0xf]
  %v28 = vld [vmem:[%s1 + $0x10] sm:$0xf]
  %v29 = vld [vmem:[%s1 + $0x14] sm:$0xf]
  %v30 = vld [vmem:[%s1 + $0x18] sm:$0xf]
  %v31 = vld [vmem:[%s2] sm:$0x1]
  %v33 = vperm.slane %v31, 0
  %v42 = vunpack.c.l.b16 %v24
  %v43 = vunpack.c.l.b16 %v25
  %v44 = vunpack.c.l.b16 %v26
  %v45 = vunpack.c.l.b16 %v27
  %v46 = vunpack.c.l.b16 %v28
  %v47 = vunpack.c.l.b16 %v29
  %v48 = vunpack.c.l.b16 %v30
  %v49 = vpack.c.b16 %v43, %v42
  %v50 = vpack.c.b16 %v45, %v44
  %v51 = vpack.c.b16 %v47, %v46
  %v52 = vpack.c.b16 %v48, %v48
  %vm56 = vcmask 457728
  %v58 = vsel %vm56, %v23, 0
  %vm60 = vcmask 1043456
  %v62 = vsel %vm60, %v52, 0
  %64 = vmatpush.bf16.msra.mxu0 0
  %65 = vmatpush.bf16.msra.mxu0 0
  %66 = vmatpush.bf16.msra.mxu0 0
  %67 = vmatpush.bf16.msra.mxu0 0
  %68 = vmatpush.bf16.msra.mxu0 %v62
  %69 = vmatpush.bf16.msra.mxu0 %v51
  %70 = vmatpush.bf16.msra.mxu0 %v50
  %71 = vmatpush.bf16.msra.mxu0 %v49
  %72 = vmatmul.bf16.gmra.mxu0 %v58
  %v73 = vpop.f32.mrf.mxu0
  %v74 = vadd.f32 %v33, %v73
  %v75 = vpop.f32.mrf.mxu0
  %76 = vdwg.mxu0
  %v77 = vmax.f32 %v74, 0.0
  %v78 = vld [vmem:[%s3] sm:$0x1]
  %v80 = vperm.slane %v78, 0
  %v82 = vmul.f32 %v77, %v80
  %vm83 = vcmask 261120
  %v84 = vsel %vm83, %v82, 0.0
  %85 = vadd.xlane.f32.xlu0 %v84
  %v86 = vpop.xlane.xlu0 %85
  %s87 = sld [smem:[#allocation2]]
  %v88 = vstv %s87
  %v89 = vadd.f32 %v86, %v88
  %vm90 = vcmask 7168
  %91 = vst.msk [vmem:[%s5] sm:$0xff] %vm90, %v89
  // Predicated region
  $region22: #{novelty_detect_forward.1} parent=0 // pred_check
    _
  $region23: #{novelty_detect_forward.1} parent=0 // pred_check_branch
    %93 = sbr.rel (0) target = $region25
  $region24: #{novelty_detect_forward.1} parent=0 // pred_region
    _
  $region25: #{novelty_detect_forward.1} parent=0 // pred_fallthru
    _
  // Predicated region
  $region26: #{novelty_detect_forward.1} parent=0 // pred_check
    _
  $region27: #{novelty_detect_forward.1} parent=0 // pred_check_branch
    %95 = sbr.rel (0) target = $region29
  $region28: #{novelty_detect_forward.1} parent=0 // pred_region
    _
  $region29: #{novelty_detect_forward.1} parent=0 // pred_fallthru
    _

</llo_original>
